<compile_context>
chip_gen: v5e
topology: v5e:2x2
jax: 0.10.0
libtpu: 0.0.40
codegen_flags: <defaults>
</compile_context>

<pallas_src>
import functools
import math

import jax
import jax.numpy as jnp
from jax import lax
from jax.experimental import pallas as pl
from jax.experimental.pallas import tpu as pltpu

d_k = d_v = 64          # module constants from the PyTorch spec
n_head = 8              # demo configuration (the kernel itself is shape-generic)

_MXU_DTYPE = jnp.bfloat16   # matmul operand dtype (accumulation stays f32)


def _choose_q_tile(Lq):
    """Largest q-tile (multiple of 8, <=128) dividing Lq, else full Lq."""
    for tq in (128, 64, 32, 16, 8):
        if Lq % tq == 0:
            return tq
    return Lq           # full-extent block is always a legal block shape


def _default_exp_dtype():
    """bf16 EUP exists on v6e/v7x; keep exp in f32 on v5e and older."""
    try:
        kind = jax.devices()[0].device_kind.lower()
    except Exception:
        return jnp.float32
    if any(v in kind for v in ("v2", "v3", "v4", "v5")):
        return jnp.float32
    return jnp.bfloat16


def _sdp_body(q_ref, k_ref, v_ref, m_ref, ctx_ref, attn_ref, *, scale, exp_dtype):
    # Blocks (leading batch/head dims squeezed away by the BlockSpecs):
    #   q: (TQ, dk)   k: (Lk, dk)   v: (Lk, dv)   m: (TQ, Lk) int8
    q = q_ref[...].astype(_MXU_DTYPE)     # no-op if the producer already emits bf16
    k = k_ref[...].astype(_MXU_DTYPE)
    v = v_ref[...].astype(_MXU_DTYPE)
    masked = m_ref[...] != 0              # (TQ, Lk) bool, once per program

    # score = Q K^T / sqrt(d_k): bf16 operands, f32 accumulation on the MXU.
    score = lax.dot_general(q, k, (((1,), (1,)), ((), ())),
                            preferred_element_type=jnp.float32) * scale
    score = jnp.where(masked, jnp.float32(-1e9), score)

    # Numerically stable softmax; matches masked_fill_ + Softmax(dim=-1)
    # (fully-masked rows degrade to uniform, as in PyTorch).
    row_max = jnp.max(score, axis=-1, keepdims=True)          # f32 bookkeeping
    p = jnp.exp((score - row_max).astype(exp_dtype))          # EUP (bf16 on v6e/v7x)
    p_f32 = p.astype(jnp.float32)
    row_sum = jnp.sum(p_f32, axis=-1, keepdims=True)          # f32 bookkeeping
    inv = pl.reciprocal(row_sum, approx=True)                 # EUP, no vector divides

    # context = softmax(score) @ V, bf16 operands + f32 accumulation.
    # Normalize AFTER the matmul: TQ*dv multiplies instead of TQ*Lk.
    ctx = lax.dot_general(p.astype(_MXU_DTYPE), v, (((1,), (0,)), ((), ())),
                          preferred_element_type=jnp.float32)
    ctx_ref[...] = (ctx * inv).astype(ctx_ref.dtype)

    if attn_ref is not None:
        attn_ref[...] = (p_f32 * inv).astype(attn_ref.dtype)


def _sdp_kernel(q_ref, k_ref, v_ref, m_ref, ctx_ref, attn_ref, *, scale, exp_dtype):
    _sdp_body(q_ref, k_ref, v_ref, m_ref, ctx_ref, attn_ref,
              scale=scale, exp_dtype=exp_dtype)


def _sdp_kernel_ctx_only(q_ref, k_ref, v_ref, m_ref, ctx_ref, *, scale, exp_dtype):
    _sdp_body(q_ref, k_ref, v_ref, m_ref, ctx_ref, None,
              scale=scale, exp_dtype=exp_dtype)


def scaled_dot_product(Q, K, V, att_mask, *, attn_dtype=None, return_attn=True,
                       exp_dtype=None):
    """context, attn = ScaledDotProduct(Q, K, V, att_mask).

    Q: (b, h, Lq, dk)   K: (b, h, Lk, dk)   V: (b, h, Lk, dv)
    att_mask: bool/int (b, Lq, Lk) or (b, 1, Lq, Lk); True == masked.
    attn_dtype: dtype of the returned attention matrix (default: Q.dtype;
                pass jnp.bfloat16 to halve the dominant HBM writeback).
    return_attn=False skips materializing attn entirely (returns (ctx, None)).
    """
    b, h, Lq, dk = Q.shape
    Lk = K.shape[2]
    dv = V.shape[3]
    # The module hard-codes const = sqrt(d_k); assert so a different head dim
    # can never silently use the wrong scale.
    assert dk == d_k, f"head dim {dk} != module constant d_k={d_k}"
    scale = 1.0 / math.sqrt(d_k)

    if att_mask.ndim == 4:                # (b, 1, Lq, Lk) -> (b, Lq, Lk)
        att_mask = att_mask[:, 0]
    mask_i8 = jnp.broadcast_to(att_mask, (b, Lq, Lk)).astype(jnp.int8)

    if attn_dtype is None:
        attn_dtype = Q.dtype
    if exp_dtype is None:
        exp_dtype = _default_exp_dtype()

    tq = _choose_q_tile(Lq)
    n_q = Lq // tq

    # BlockSpecs.  q-tile axis is innermost, so K/V (index maps independent of
    # the q-tile index) keep their VMEM copies across consecutive q-tiles; the
    # mask index map ignores the head index.
    q_spec = pl.BlockSpec((None, None, tq, dk), lambda bi, hi, qi: (bi, hi, qi, 0))
    k_spec = pl.BlockSpec((None, None, Lk, dk), lambda bi, hi, qi: (bi, hi, 0, 0))
    v_spec = pl.BlockSpec((None, None, Lk, dv), lambda bi, hi, qi: (bi, hi, 0, 0))
    m_spec = pl.BlockSpec((None, tq, Lk), lambda bi, hi, qi: (bi, qi, 0))
    ctx_spec = pl.BlockSpec((None, None, tq, dv), lambda bi, hi, qi: (bi, hi, qi, 0))
    attn_spec = pl.BlockSpec((None, None, tq, Lk), lambda bi, hi, qi: (bi, hi, qi, 0))

    compiler_params = pltpu.CompilerParams(
        dimension_semantics=("parallel", "parallel", "arbitrary"),
        vmem_limit_bytes=32 * 1024 * 1024,   # explicit budget, safe on v5e/v6e/v7x
    )

    if return_attn:
        kernel = functools.partial(_sdp_kernel, scale=scale, exp_dtype=exp_dtype)
        ctx, attn = pl.pallas_call(
            kernel,
            out_shape=(jax.ShapeDtypeStruct((b, h, Lq, dv), Q.dtype),
                       jax.ShapeDtypeStruct((b, h, Lq, Lk), attn_dtype)),
            grid_spec=pltpu.PrefetchScalarGridSpec(
                num_scalar_prefetch=0,
                grid=(b, h, n_q),
                in_specs=[q_spec, k_spec, v_spec, m_spec],
                out_specs=[ctx_spec, attn_spec]),
            compiler_params=compiler_params,
        )(Q, K, V, mask_i8)
        return ctx, attn

    kernel = functools.partial(_sdp_kernel_ctx_only, scale=scale, exp_dtype=exp_dtype)
    ctx = pl.pallas_call(
        kernel,
        out_shape=jax.ShapeDtypeStruct((b, h, Lq, dv), Q.dtype),
        grid_spec=pltpu.PrefetchScalarGridSpec(
            num_scalar_prefetch=0,
            grid=(b, h, n_q),
            in_specs=[q_spec, k_spec, v_spec, m_spec],
            out_specs=ctx_spec),
        compiler_params=compiler_params,
    )(Q, K, V, mask_i8)
    return ctx, None


def _reference(Q, K, V, att_mask):
    """Pure-JAX f32 reference of the PyTorch forward."""
    scale = 1.0 / math.sqrt(d_k)
    score = jnp.einsum("bhqd,bhkd->bhqk", Q, K) * scale
    score = jnp.where(att_mask[:, None, :, :], -1.0e9, score)
    attn = jax.nn.softmax(score, axis=-1)
    ctx = jnp.einsum("bhqk,bhkd->bhqd", attn, V)
    return ctx, attn


if __name__ == "__main__":
    key = jax.random.PRNGKey(0)
    kq, kk, kv = jax.random.split(key, 3)

    batch, Lq, Lk = 2, 8, 8
    Q = jax.random.normal(kq, (batch, n_head, Lq, d_k), jnp.float32)
    K = jax.random.normal(kk, (batch, n_head, Lk, d_k), jnp.float32)
    V = jax.random.normal(kv, (batch, n_head, Lk, d_v), jnp.float32)

    # causal mask (True == masked), shared across heads
    causal = jnp.triu(jnp.ones((Lq, Lk), jnp.bool_), k=1)
    att_mask = jnp.broadcast_to(causal, (batch, Lq, Lk))

    ctx_ref, attn_ref = _reference(Q, K, V, att_mask)

    # 1) default path: f32 in/out, bf16 MXU operands, f32 accumulation,
    #    approx-reciprocal softmax denominator.
    fwd = jax.jit(scaled_dot_product)
    ctx, attn = fwd(Q, K, V, att_mask)
    jax.block_until_ready((ctx, attn))
    assert ctx.shape == (batch, n_head, Lq, d_v)
    assert attn.shape == (batch, n_head, Lq, Lk)
    assert jnp.allclose(attn, attn_ref, atol=5e-2, rtol=5e-2)
    assert jnp.allclose(ctx, ctx_ref, atol=1e-1, rtol=1e-1)

    # 2) context-only path (skips the attn HBM writeback entirely).
    fwd_ctx = jax.jit(functools.partial(scaled_dot_product, return_attn=False))
    ctx2, _ = fwd_ctx(Q, K, V, att_mask)
    jax.block_until_ready(ctx2)
    assert jnp.allclose(ctx2, ctx_ref, atol=1e-1, rtol=1e-1)

    # 3) bf16 end-to-end: bf16 Q/K/V accepted directly (no wrapper-side cast),
    #    attn stored in bf16 (half the dominant writeback bytes).
    fwd_bf16 = jax.jit(functools.partial(scaled_dot_product,
                                         attn_dtype=jnp.bfloat16))
    ctx3, attn3 = fwd_bf16(Q.astype(jnp.bfloat16), K.astype(jnp.bfloat16),
                           V.astype(jnp.bfloat16), att_mask)
    jax.block_until_ready((ctx3, attn3))
    assert jnp.allclose(attn3.astype(jnp.float32), attn_ref, atol=1e-1, rtol=1e-1)
    assert jnp.allclose(ctx3.astype(jnp.float32), ctx_ref, atol=2e-1, rtol=2e-1)

    print("KERNEL_OK")
</pallas_src>

<mosaic_0001>
module attributes {stable_mosaic.version = 11 : i64} {
  func.func @_sdp_kernel(%arg0: i32, %arg1: i32, %arg2: i32, %arg3: memref<1x1x8x64xf32, #tpu.memory_space<vmem>>, %arg4: memref<1x1x8x64xf32, #tpu.memory_space<vmem>>, %arg5: memref<1x1x8x64xf32, #tpu.memory_space<vmem>>, %arg6: memref<1x8x8xi8, #tpu.memory_space<vmem>>, %arg7: memref<1x1x8x64xf32, #tpu.memory_space<vmem>>, %arg8: memref<1x1x8x8xf32, #tpu.memory_space<vmem>>) attributes {dimension_semantics = [#tpu.dimension_semantics<parallel>, #tpu.dimension_semantics<parallel>, #tpu.dimension_semantics<arbitrary>], iteration_bounds = array<i64: 2, 8, 1>, scalar_prefetch = 0 : i64, scratch_operands = 0 : i64, tpu.core_type = #tpu.core_type<tc>, window_params = [{transform_indices = @transform_0, window_bounds = array<i64: 1, 1, 8, 64>}, {transform_indices = @transform_1, window_bounds = array<i64: 1, 1, 8, 64>}, {transform_indices = @transform_2, window_bounds = array<i64: 1, 1, 8, 64>}, {transform_indices = @transform_3, window_bounds = array<i64: 1, 8, 8>}, {transform_indices = @transform_4, window_bounds = array<i64: 1, 1, 8, 64>}, {transform_indices = @transform_5, window_bounds = array<i64: 1, 1, 8, 8>}]} {
    %c0 = arith.constant 0 : index
    %c0_0 = arith.constant 0 : index
    %c0_1 = arith.constant 0 : index
    %c0_2 = arith.constant 0 : index
    %0 = vector.load %arg3[%c0, %c0_0, %c0_1, %c0_2] : memref<1x1x8x64xf32, #tpu.memory_space<vmem>>, vector<1x1x8x64xf32>
    %1 = vector.shape_cast %0 : vector<1x1x8x64xf32> to vector<8x64xf32>
    %2 = arith.truncf %1 : vector<8x64xf32> to vector<8x64xbf16>
    %c0_3 = arith.constant 0 : index
    %c0_4 = arith.constant 0 : index
    %c0_5 = arith.constant 0 : index
    %c0_6 = arith.constant 0 : index
    %3 = vector.load %arg4[%c0_3, %c0_4, %c0_5, %c0_6] : memref<1x1x8x64xf32, #tpu.memory_space<vmem>>, vector<1x1x8x64xf32>
    %4 = vector.shape_cast %3 : vector<1x1x8x64xf32> to vector<8x64xf32>
    %5 = arith.truncf %4 : vector<8x64xf32> to vector<8x64xbf16>
    %c0_7 = arith.constant 0 : index
    %c0_8 = arith.constant 0 : index
    %c0_9 = arith.constant 0 : index
    %c0_10 = arith.constant 0 : index
    %6 = vector.load %arg5[%c0_7, %c0_8, %c0_9, %c0_10] : memref<1x1x8x64xf32, #tpu.memory_space<vmem>>, vector<1x1x8x64xf32>
    %7 = vector.shape_cast %6 : vector<1x1x8x64xf32> to vector<8x64xf32>
    %8 = arith.truncf %7 : vector<8x64xf32> to vector<8x64xbf16>
    %c0_11 = arith.constant 0 : index
    %c0_12 = arith.constant 0 : index
    %c0_13 = arith.constant 0 : index
    %9 = vector.load %arg6[%c0_11, %c0_12, %c0_13] : memref<1x8x8xi8, #tpu.memory_space<vmem>>, vector<1x8x8xi8>
    %10 = vector.shape_cast %9 : vector<1x8x8xi8> to vector<8x8xi8>
    %c0_i8 = arith.constant 0 : i8
    %11 = vector.broadcast %c0_i8 : i8 to vector<8x8xi8>
    %12 = arith.cmpi ne, %10, %11 : vector<8x8xi8>
    %cst = arith.constant dense<0.000000e+00> : vector<8x8xf32>
    %13 = tpu.matmul %2, %5, %cst {dimension_numbers = #tpu.dot_dimension_numbers<[1], [1], [0], [0], [0, 0, 1, 0], [], []>} : vector<8x64xbf16>, vector<8x64xbf16>, vector<8x8xf32> -> vector<8x8xf32>
    %cst_14 = arith.constant 1.250000e-01 : f32
    %14 = vector.broadcast %cst_14 : f32 to vector<8x8xf32>
    %15 = arith.mulf %13, %14 : vector<8x8xf32>
    %cst_15 = arith.constant -1.000000e+09 : f32
    %16 = vector.broadcast %cst_15 : f32 to vector<8x8xf32>
    %17 = arith.select %12, %16, %15 : vector<8x8xi1>, vector<8x8xf32>
    %cst_16 = arith.constant dense<0xFF800000> : vector<8xf32>
    %18 = vector.multi_reduction <maximumf>, %17, %cst_16 [1] : vector<8x8xf32> to vector<8xf32>
    %19 = vector.shape_cast %18 : vector<8xf32> to vector<8x1xf32>
    %20 = vector.broadcast %19 : vector<8x1xf32> to vector<8x8xf32>
    %21 = arith.subf %17, %20 : vector<8x8xf32>
    %22 = arith.truncf %21 : vector<8x8xf32> to vector<8x8xbf16>
    %23 = math.exp %22 : vector<8x8xbf16>
    %24 = arith.extf %23 : vector<8x8xbf16> to vector<8x8xf32>
    %cst_17 = arith.constant dense<0.000000e+00> : vector<8xf32>
    %25 = vector.multi_reduction <add>, %24, %cst_17 [1] : vector<8x8xf32> to vector<8xf32>
    %26 = vector.shape_cast %25 : vector<8xf32> to vector<8x1xf32>
    %27 = tpu.reciprocal %26 {approx = true} : vector<8x1xf32> -> vector<8x1xf32>
    %cst_18 = arith.constant dense<0.000000e+00> : vector<8x64xf32>
    %28 = tpu.matmul %23, %8, %cst_18 {dimension_numbers = #tpu.dot_dimension_numbers<[1], [0], [0], [1], [0, 0, 1, 1], [], []>} : vector<8x8xbf16>, vector<8x64xbf16>, vector<8x64xf32> -> vector<8x64xf32>
    %29 = vector.broadcast %27 : vector<8x1xf32> to vector<8x64xf32>
    %30 = arith.mulf %28, %29 : vector<8x64xf32>
    %c0_19 = arith.constant 0 : index
    %c0_20 = arith.constant 0 : index
    %c0_21 = arith.constant 0 : index
    %c0_22 = arith.constant 0 : index
    %31 = vector.load %arg7[%c0_19, %c0_20, %c0_21, %c0_22] : memref<1x1x8x64xf32, #tpu.memory_space<vmem>>, vector<1x1x8x64xf32>
    %32 = vector.shape_cast %31 : vector<1x1x8x64xf32> to vector<8x64xf32>
    %33 = vector.shape_cast %30 : vector<8x64xf32> to vector<1x1x8x64xf32>
    tpu.vector_store %arg7[%c0_19, %c0_20, %c0_21, %c0_22], %33 {strides = array<i32>} : memref<1x1x8x64xf32, #tpu.memory_space<vmem>>, vector<1x1x8x64xf32>,
    %34 = vector.broadcast %27 : vector<8x1xf32> to vector<8x8xf32>
    %35 = arith.mulf %24, %34 : vector<8x8xf32>
    %c0_23 = arith.constant 0 : index
    %c0_24 = arith.constant 0 : index
    %c0_25 = arith.constant 0 : index
    %c0_26 = arith.constant 0 : index
    %36 = vector.load %arg8[%c0_23, %c0_24, %c0_25, %c0_26] : memref<1x1x8x8xf32, #tpu.memory_space<vmem>>, vector<1x1x8x8xf32>
    %37 = vector.shape_cast %36 : vector<1x1x8x8xf32> to vector<8x8xf32>
    %38 = vector.shape_cast %35 : vector<8x8xf32> to vector<1x1x8x8xf32>
    tpu.vector_store %arg8[%c0_23, %c0_24, %c0_25, %c0_26], %38 {strides = array<i32>} : memref<1x1x8x8xf32, #tpu.memory_space<vmem>>, vector<1x1x8x8xf32>,
    return
  }
  func.func @transform_0(%arg0: i32, %arg1: i32, %arg2: i32) -> (i32, i32, i32, i32) {
    %c0_i32 = arith.constant 0 : i32
    %c0_i32_0 = arith.constant 0 : i32
    return %arg0, %arg1, %arg2, %c0_i32 : i32, i32, i32, i32
  }
  func.func @transform_1(%arg0: i32, %arg1: i32, %arg2: i32) -> (i32, i32, i32, i32) {
    %c0_i32 = arith.constant 0 : i32
    %c0_i32_0 = arith.constant 0 : i32
    %c0_i32_1 = arith.constant 0 : i32
    return %arg0, %arg1, %c0_i32, %c0_i32_0 : i32, i32, i32, i32
  }
  func.func @transform_2(%arg0: i32, %arg1: i32, %arg2: i32) -> (i32, i32, i32, i32) {
    %c0_i32 = arith.constant 0 : i32
    %c0_i32_0 = arith.constant 0 : i32
    %c0_i32_1 = arith.constant 0 : i32
    return %arg0, %arg1, %c0_i32, %c0_i32_0 : i32, i32, i32, i32
  }
  func.func @transform_3(%arg0: i32, %arg1: i32, %arg2: i32) -> (i32, i32, i32) {
    %c0_i32 = arith.constant 0 : i32
    %c0_i32_0 = arith.constant 0 : i32
    return %arg0, %arg2, %c0_i32 : i32, i32, i32
  }
  func.func @transform_4(%arg0: i32, %arg1: i32, %arg2: i32) -> (i32, i32, i32, i32) {
    %c0_i32 = arith.constant 0 : i32
    %c0_i32_0 = arith.constant 0 : i32
    return %arg0, %arg1, %arg2, %c0_i32 : i32, i32, i32, i32
  }
  func.func @transform_5(%arg0: i32, %arg1: i32, %arg2: i32) -> (i32, i32, i32, i32) {
    %c0_i32 = arith.constant 0 : i32
    %c0_i32_0 = arith.constant 0 : i32
    return %arg0, %arg1, %arg2, %c0_i32 : i32, i32, i32, i32
  }
}

</mosaic_0001>

<llo_original>
// kernel: scaled_dot_product.1
$region0: #{scaled_dot_product.1}
  #allocation0 [shape = 'u32[]', space=smem, size = 0x4, offset = 0x4, fixed_abs, tag = 'smem constant byte address 0x4 - core index']
  #allocation1 [shape = 'u32[72,128]{1,0:T(1,128)}', space=vmem, size = 0x9000, scoped, tag = 'internal scratch']
  %s0 = inlined_call_operand.hbm [shape: f32[2,8,8,64], index: 0, kind: input, shape index: {}]
  %s1 = inlined_call_operand.hbm [shape: f32[2,8,8,64], index: 1, kind: input, shape index: {}]
  %s2 = inlined_call_operand.hbm [shape: f32[2,8,8,64], index: 2, kind: input, shape index: {}]
  %s3 = inlined_call_operand.vmem [shape: s8[2,8,8], index: 3, kind: input, shape index: {}]
  %s4 = inlined_call_operand.hbm [shape: f32[2,8,8,64], index: 4, kind: output, shape index: {0}]
  %s5 = inlined_call_operand.hbm [shape: f32[2,8,8,8], index: 5, kind: output, shape index: {1}]
  %6 = xla_tuple %s4, %s5
  %s7 = sld [smem:[#allocation0]]
  $region69: #{scaled_dot_product.1} parent=0
    _
  %s9 = ssub.s32 1, %s7
  %s10 = scalar_select 0, %s9, %s7
  $region1: #{scaled_dot_product.1} parent=0
    #allocation2 [shape = 'u8[8192]{0}', space=vmem, size = 0x2000, scoped, tag = 'input window, operand 0']
    #allocation3 [shape = 's32[2]{0}', space=sflag, size = 0x8, scoped, tag = 'scoped memory for scaled_dot_product.1']
    #allocation4 [shape = 's32[2]{0}', space=sflag, size = 0x8, scoped, tag = 'scoped memory for scaled_dot_product.1']
    #allocation5 [shape = 'u8[8192]{0}', space=vmem, size = 0x2000, scoped, tag = 'input window, operand 1']
    #allocation6 [shape = 's32[2]{0}', space=sflag, size = 0x8, scoped, tag = 'scoped memory for scaled_dot_product.1']
    #allocation7 [shape = 'u8[8192]{0}', space=vmem, size = 0x2000, scoped, tag = 'input window, operand 2']
    #allocation8 [shape = 'u8[8192]{0}', space=vmem, size = 0x2000, scoped, tag = 'output window, operand 0']
    #allocation9 [shape = 'u8[8192]{0}', space=vmem, size = 0x2000, scoped, tag = 'output window, operand 1']
    #allocation10 [shape = 's32[2]{0}', space=sflag, size = 0x8, scoped, tag = 'scoped memory for scaled_dot_product.1']
    %11 = vsyncpa [#allocation3], 0
    %s12 = scalar_lea.sflag [#allocation3], 1
    %13 = vsyncpa %s12, 0
    %14 = vsyncpa [#allocation6], 0
    %s15 = scalar_lea.sflag [#allocation6], 1
    %16 = vsyncpa %s15, 0
    %17 = vsyncpa [#allocation4], 0
    %s18 = scalar_lea.sflag [#allocation4], 1
    %19 = vsyncpa %s18, 0
    %20 = vsyncpa [#allocation10], 0
    %s21 = scalar_lea.sflag [#allocation10], 1
    %22 = vsyncpa %s21, 0
    loop: start=0, step=1, limit=18
    $region2: #{scaled_dot_product.1} parent=1 // loop_pre_header
      _
    $region3: #{scaled_dot_product.1} parent=1 // loop_header
      %s24 = sphi 0, %s28
      %p25 = scmp.ge.s32.totalorder %s24, 18
      %s31 = sphi 0, %s50
      %s32 = sphi 0, %s46
      %s33 = sphi 0, %s42
      %s34 = sphi 0, %s31
      %s35 = sphi 0, %s32
      %s36 = sphi 0, %s33
      %s37 = sphi 0, %s34
      %s38 = sphi 0, %s35
      %s39 = sphi 0, %s36
      %s57 = sphi 0, %s59
      %s60 = sphi 0, %s57
      %s61 = sphi 0, %s60
      %s77 = sphi 0, %s61
      %s85 = sphi 0, %s87
      %s88 = sphi 0, %s85
      %s89 = sphi 0, %s88
      %s105 = sphi 0, %s89
      %s113 = sphi 0, %s115
      %s116 = sphi 0, %s113
      %s117 = sphi 0, %s116
      %s133 = sphi 0, %s117
      %s141 = sphi 0, %s143
      %s144 = sphi 0, %s141
      %s145 = sphi 0, %s144
      %s161 = sphi 0, %s145
      %s171 = sphi 0, %s173
      %s174 = sphi 0, %s171
      %s175 = sphi 0, %s174
      %s191 = sphi 0, %s175
      %s201 = sphi 0, %s203
      %s204 = sphi 0, %s201
      %s205 = sphi 0, %s204
      %s221 = sphi 0, %s205
    $region4: #{scaled_dot_product.1} parent=1 // loop_header_branch
      %27 = sbr.rel (%p25) target = $region8
    $region5: #{scaled_dot_product.1} parent=1 // loop_body
      %s29 = ssub.s32 %s24, 1
      %s30 = ssub.s32 %s24, 2
      %s40 = sadd.s32 1, %s33
      %p41 = scmp.ge.s32.totalorder %s40, 1
      %s42 = scalar_select %p41, 0, %s40
      %s43 = sadd.s32 1, %s32
      %s44 = scalar_select %p41, %s43, %s32
      %p45 = scmp.ge.s32.totalorder %s44, 8
      %s46 = scalar_select %p45, 0, %s44
      %s47 = sadd.s32 1, %s31
      %s48 = scalar_select %p45, %s47, %s31
      %p49 = scmp.ge.s32.totalorder %s48, 2
      %s50 = scalar_select %p49, 0, %s48
      %s51 = ssub.s32 %s31, %s50
      %s52 = ssub.s32 %s32, %s46
      %s53 = sor.u32 %s51, %s52
      %s54 = ssub.s32 %s33, %s42
      %s55 = sor.u32 %s53, %s54
      %p56 = scmp.eq.s32.totalorder %s55, 0
      %s58 = sadd.s32 %s57, 1
      %s59 = scalar_select %p56, %s57, %s58
      %p62 = pneg %p56
      %p63 = scmp.eq.s32.totalorder %s24, 15
      %p64 = por %p62, %p63
      %p65 = scmp.ne.s32.totalorder %s57, %s60
      %p66 = scmp.eq.s32.totalorder %s24, 0
      %p67 = por %p65, %p66
      %p68 = scmp.ne.s32.totalorder %s57, %s60
      %p69 = scmp.eq.s32.totalorder %s29, 15
      %p70 = por %p68, %p69
      %p71 = scmp.ne.s32.totalorder %s60, %s61
      %p72 = scmp.eq.s32.totalorder %s29, 0
      %p73 = por %p71, %p72
      %p74 = scmp.ne.s32.totalorder %s60, %s61
      %p75 = scmp.eq.s32.totalorder %s30, 15
      %p76 = por %p74, %p75
      %p78 = scmp.ne.s32.totalorder %s61, %s77
      %p79 = scmp.eq.s32.totalorder %s30, 0
      %p80 = por %p78, %p79
      %s81 = ssub.s32 %s31, %s50
      %s82 = ssub.s32 %s32, %s46
      %s83 = sor.u32 %s81, %s82
      %p84 = scmp.eq.s32.totalorder %s83, 0
      %s86 = sadd.s32 %s85, 1
      %s87 = scalar_select %p84, %s85, %s86
      %p90 = pneg %p84
      %p91 = scmp.eq.s32.totalorder %s24, 15
      %p92 = por %p90, %p91
      %p93 = scmp.ne.s32.totalorder %s85, %s88
      %p94 = scmp.eq.s32.totalorder %s24, 0
      %p95 = por %p93, %p94
      %p96 = scmp.ne.s32.totalorder %s85, %s88
      %p97 = scmp.eq.s32.totalorder %s29, 15
      %p98 = por %p96, %p97
      %p99 = scmp.ne.s32.totalorder %s88, %s89
      %p100 = scmp.eq.s32.totalorder %s29, 0
      %p101 = por %p99, %p100
      %p102 = scmp.ne.s32.totalorder %s88, %s89
      %p103 = scmp.eq.s32.totalorder %s30, 15
      %p104 = por %p102, %p103
      %p106 = scmp.ne.s32.totalorder %s89, %s105
      %p107 = scmp.eq.s32.totalorder %s30, 0
      %p108 = por %p106, %p107
      %s109 = ssub.s32 %s31, %s50
      %s110 = ssub.s32 %s32, %s46
      %s111 = sor.u32 %s109, %s110
      %p112 = scmp.eq.s32.totalorder %s111, 0
      %s114 = sadd.s32 %s113, 1
      %s115 = scalar_select %p112, %s113, %s114
      %p118 = pneg %p112
      %p119 = scmp.eq.s32.totalorder %s24, 15
      %p120 = por %p118, %p119
      %p121 = scmp.ne.s32.totalorder %s113, %s116
      %p122 = scmp.eq.s32.totalorder %s24, 0
      %p123 = por %p121, %p122
      %p124 = scmp.ne.s32.totalorder %s113, %s116
      %p125 = scmp.eq.s32.totalorder %s29, 15
      %p126 = por %p124, %p125
      %p127 = scmp.ne.s32.totalorder %s116, %s117
      %p128 = scmp.eq.s32.totalorder %s29, 0
      %p129 = por %p127, %p128
      %p130 = scmp.ne.s32.totalorder %s116, %s117
      %p131 = scmp.eq.s32.totalorder %s30, 15
      %p132 = por %p130, %p131
      %p134 = scmp.ne.s32.totalorder %s117, %s133
      %p135 = scmp.eq.s32.totalorder %s30, 0
      %p136 = por %p134, %p135
      %s137 = ssub.s32 %s31, %s50
      %s138 = ssub.s32 %s33, %s42
      %s139 = sor.u32 %s137, %s138
      %p140 = scmp.eq.s32.totalorder %s139, 0
      %s142 = sadd.s32 %s141, 1
      %s143 = scalar_select %p140, %s141, %s142
      %p146 = pneg %p140
      %p147 = scmp.eq.s32.totalorder %s24, 15
      %p148 = por %p146, %p147
      %p149 = scmp.ne.s32.totalorder %s141, %s144
      %p150 = scmp.eq.s32.totalorder %s24, 0
      %p151 = por %p149, %p150
      %p152 = scmp.ne.s32.totalorder %s141, %s144
      %p153 = scmp.eq.s32.totalorder %s29, 15
      %p154 = por %p152, %p153
      %p155 = scmp.ne.s32.totalorder %s144, %s145
      %p156 = scmp.eq.s32.totalorder %s29, 0
      %p157 = por %p155, %p156
      %p158 = scmp.ne.s32.totalorder %s144, %s145
      %p159 = scmp.eq.s32.totalorder %s30, 15
      %p160 = por %p158, %p159
      %p162 = scmp.ne.s32.totalorder %s145, %s161
      %p163 = scmp.eq.s32.totalorder %s30, 0
      %p164 = por %p162, %p163
      %s165 = ssub.s32 %s31, %s50
      %s166 = ssub.s32 %s32, %s46
      %s167 = sor.u32 %s165, %s166
      %s168 = ssub.s32 %s33, %s42
      %s169 = sor.u32 %s167, %s168
      %p170 = scmp.eq.s32.totalorder %s169, 0
      %s172 = sadd.s32 %s171, 1
      %s173 = scalar_select %p170, %s171, %s172
      %p176 = pneg %p170
      %p177 = scmp.eq.s32.totalorder %s24, 15
      %p178 = por %p176, %p177
      %p179 = scmp.ne.s32.totalorder %s171, %s174
      %p180 = scmp.eq.s32.totalorder %s24, 0
      %p181 = por %p179, %p180
      %p182 = scmp.ne.s32.totalorder %s171, %s174
      %p183 = scmp.eq.s32.totalorder %s29, 15
      %p184 = por %p182, %p183
      %p185 = scmp.ne.s32.totalorder %s174, %s175
      %p186 = scmp.eq.s32.totalorder %s29, 0
      %p187 = por %p185, %p186
      %p188 = scmp.ne.s32.totalorder %s174, %s175
      %p189 = scmp.eq.s32.totalorder %s30, 15
      %p190 = por %p188, %p189
      %p192 = scmp.ne.s32.totalorder %s175, %s191
      %p193 = scmp.eq.s32.totalorder %s30, 0
      %p194 = por %p192, %p193
      %s195 = ssub.s32 %s31, %s50
      %s196 = ssub.s32 %s32, %s46
      %s197 = sor.u32 %s195, %s196
      %s198 = ssub.s32 %s33, %s42
      %s199 = sor.u32 %s197, %s198
      %p200 = scmp.eq.s32.totalorder %s199, 0
      %s202 = sadd.s32 %s201, 1
      %s203 = scalar_select %p200, %s201, %s202
      %p206 = pneg %p200
      %p207 = scmp.eq.s32.totalorder %s24, 15
      %p208 = por %p206, %p207
      %p209 = scmp.ne.s32.totalorder %s201, %s204
      %p210 = scmp.eq.s32.totalorder %s24, 0
      %p211 = por %p209, %p210
      %p212 = scmp.ne.s32.totalorder %s201, %s204
      %p213 = scmp.eq.s32.totalorder %s29, 15
      %p214 = por %p212, %p213
      %p215 = scmp.ne.s32.totalorder %s204, %s205
      %p216 = scmp.eq.s32.totalorder %s29, 0
      %p217 = por %p215, %p216
      %p218 = scmp.ne.s32.totalorder %s204, %s205
      %p219 = scmp.eq.s32.totalorder %s30, 15
      %p220 = por %p218, %p219
      %p222 = scmp.ne.s32.totalorder %s205, %s221
      %p223 = scmp.eq.s32.totalorder %s30, 0
      %p224 = por %p222, %p223
      %p225 = scmp.le.s32.totalorder 1, %s24
      %p226 = scmp.lt.s32.totalorder %s24, 17
      %p227 = pnand %p225, %p226
      %p228 = pneg %p227
      // Predicated region
      $region9: #{scaled_dot_product.1} parent=5 // pred_check
        _
      $region10: #{scaled_dot_product.1} parent=5 // pred_check_branch
        %230 = sbr.rel (%p227) target = $region12
      $region11: #{scaled_dot_product.1} parent=5 // pred_region
        %s231 = ssub.s32 %s24, 1
      $region12: #{scaled_dot_product.1} parent=5 // pred_fallthru
        _
      %p232 = scmp.lt.s32.totalorder %s24, 16
      // Predicated region
      $region13: #{scaled_dot_product.1} parent=5 // pred_check
        %p233 = pneg %p232
      $region14: #{scaled_dot_product.1} parent=5 // pred_check_branch
        %235 = sbr.rel (%p233) target = $region16
      $region15: #{scaled_dot_product.1} parent=5 // pred_region
        // Predicated region
        $region17: #{scaled_dot_product.1} parent=15 // pred_check
          %p236 = pneg %p67
        $region18: #{scaled_dot_product.1} parent=15 // pred_check_branch
          %238 = sbr.rel (%p236) target = $region20
        $region19: #{scaled_dot_product.1} parent=15 // pred_region
          %s239 = sand.u32 %s57, 1
          %s240 = scalar_lea.sflag [#allocation3], %s239
          %s241 = sand.u32 %s57, 1
          %s242 = smul.addr %s241, 8
          %s243 = scalar_lea.vmem [#allocation2], %s242
          %245 = vsyncadd %s240, 0
          %s246 = sadd.s32 %s33, %s32
          %s247 = smul.addr %s31, 8
          %s248 = sadd.s32 %s246, %s247
          %s249 = smul.addr %s248, 8
          %s250 = scalar_lea.hbm %s0, %s249
          %s252 = sshll.u32 %s250, 4
          %s253 = int_to_ptr.hbm [resolvable:$true] %s252
          %s254 = sshll.u32 %s243, 4
          %s255 = int_to_ptr.vmem [resolvable:$true] %s254
          %257 = dma.hbm_to_vmem [thread:$0]  %s253, 128, %s255, %s240
        $region20: #{scaled_dot_product.1} parent=15 // pred_fallthru
          _
        // Predicated region
        $region21: #{scaled_dot_product.1} parent=15 // pred_check
          %p258 = pneg %p95
        $region22: #{scaled_dot_product.1} parent=15 // pred_check_branch
          %260 = sbr.rel (%p258) target = $region24
        $region23: #{scaled_dot_product.1} parent=15 // pred_region
          %s261 = sand.u32 %s24, 1
          %s262 = scalar_lea.sflag [#allocation6], %s261
          %s263 = sand.u32 %s85, 1
          %s264 = smul.addr %s263, 8
          %s265 = scalar_lea.vmem [#allocation5], %s264
          %267 = vsyncadd %s262, 0
          %s268 = smul.addr %s31, 8
          %s269 = sadd.s32 %s32, %s268
          %s270 = smul.addr %s269, 8
          %s271 = scalar_lea.hbm %s1, %s270
          %s273 = sshll.u32 %s271, 4
          %s274 = int_to_ptr.hbm [resolvable:$true] %s273
          %s275 = sshll.u32 %s265, 4
          %s276 = int_to_ptr.vmem [resolvable:$true] %s275
          %278 = dma.hbm_to_vmem [thread:$0]  %s274, 128, %s276, %s262
        $region24: #{scaled_dot_product.1} parent=15 // pred_fallthru
          _
        // Predicated region
        $region25: #{scaled_dot_product.1} parent=15 // pred_check
          %p279 = pneg %p123
        $region26: #{scaled_dot_product.1} parent=15 // pred_check_branch
          %281 = sbr.rel (%p279) target = $region28
        $region27: #{scaled_dot_product.1} parent=15 // pred_region
          %s282 = sand.u32 %s24, 1
          %s283 = scalar_lea.sflag [#allocation6], %s282
          %s284 = sand.u32 %s113, 1
          %s285 = smul.addr %s284, 8
          %s286 = scalar_lea.vmem [#allocation7], %s285
          %288 = vsyncadd %s283, 0
          %s289 = smul.addr %s31, 8
          %s290 = sadd.s32 %s32, %s289
          %s291 = smul.addr %s290, 8
          %s292 = scalar_lea.hbm %s2, %s291
          %s294 = sshll.u32 %s292, 4
          %s295 = int_to_ptr.hbm [resolvable:$true] %s294
          %s296 = sshll.u32 %s286, 4
          %s297 = int_to_ptr.vmem [resolvable:$true] %s296
          %299 = dma.hbm_to_vmem [thread:$0]  %s295, 128, %s297, %s283
        $region28: #{scaled_dot_product.1} parent=15 // pred_fallthru
          _
        // Predicated region
        $region29: #{scaled_dot_product.1} parent=15 // pred_check
          %p300 = pneg %p151
        $region30: #{scaled_dot_product.1} parent=15 // pred_check_branch
          %302 = sbr.rel (%p300) target = $region32
        $region31: #{scaled_dot_product.1} parent=15 // pred_region
          %p303 = scmp.lt.s32.totalorder %s31, 1
          %s304 = scalar_select %p303, %s31, 1
          %p305 = scmp.lt.s32.totalorder %s33, 0
          %s306 = scalar_select %p305, %s33, 0
          %s307 = sadd.s32 %s306, %s304
          %s308 = smul.addr %s307, 2
          %s309 = scalar_lea.vmem %s3, %s308
        $region32: #{scaled_dot_product.1} parent=15 // pred_fallthru
          _
      $region16: #{scaled_dot_product.1} parent=5 // pred_fallthru
        _
      %p310 = scmp.le.s32.totalorder 1, %s24
      %p311 = scmp.lt.s32.totalorder %s24, 17
      %p312 = pnand %p310, %p311
      %p313 = pneg %p312
      // Predicated region
      $region33: #{scaled_dot_product.1} parent=5 // pred_check
        _
      $region34: #{scaled_dot_product.1} parent=5 // pred_check_branch
        %315 = sbr.rel (%p312) target = $region36
      $region35: #{scaled_dot_product.1} parent=5 // pred_region
        %s316 = ssub.s32 %s24, 1
        %s317 = sand.u32 %s60, 1
        %s318 = scalar_lea.sflag [#allocation3], %s317
        %s319 = sand.u32 %s60, 1
        %s320 = smul.addr %s319, 8
        %s321 = scalar_lea.vmem [#allocation2], %s320
        // Predicated region
        $region37: #{scaled_dot_product.1} parent=35 // pred_check
          %p322 = pneg %p73
        $region38: #{scaled_dot_product.1} parent=35 // pred_check_branch
          %324 = sbr.rel (%p322) target = $region40
        $region39: #{scaled_dot_product.1} parent=35 // pred_region
          %326 = dma.done %s318, 128
        $region40: #{scaled_dot_product.1} parent=35 // pred_fallthru
          _
        %s327 = sand.u32 %s29, 1
        %s328 = scalar_lea.sflag [#allocation6], %s327
        %s329 = sand.u32 %s88, 1
        %s330 = smul.addr %s329, 8
        %s331 = scalar_lea.vmem [#allocation5], %s330
        // Predicated region
        $region41: #{scaled_dot_product.1} parent=35 // pred_check
          %p332 = pneg %p101
        $region42: #{scaled_dot_product.1} parent=35 // pred_check_branch
          %334 = sbr.rel (%p332) target = $region44
        $region43: #{scaled_dot_product.1} parent=35 // pred_region
          %336 = dma.done %s328, 128
        $region44: #{scaled_dot_product.1} parent=35 // pred_fallthru
          _
        %s337 = sand.u32 %s29, 1
        %s338 = scalar_lea.sflag [#allocation6], %s337
        %s339 = sand.u32 %s116, 1
        %s340 = smul.addr %s339, 8
        %s341 = scalar_lea.vmem [#allocation7], %s340
        // Predicated region
        $region45: #{scaled_dot_product.1} parent=35 // pred_check
          %p342 = pneg %p129
        $region46: #{scaled_dot_product.1} parent=35 // pred_check_branch
          %344 = sbr.rel (%p342) target = $region48
        $region47: #{scaled_dot_product.1} parent=35 // pred_region
          %346 = dma.done %s338, 128
        $region48: #{scaled_dot_product.1} parent=35 // pred_fallthru
          _
        %s347 = sand.u32 %s60, 1
        %s348 = scalar_lea.sflag [#allocation3], %s347
        %s349 = sand.u32 %s60, 1
        %s350 = smul.addr %s349, 8
        %s351 = scalar_lea.vmem [#allocation2], %s350
        %p352 = pneg %p73
        %p353 = pneg %p70
        %s354 = sand.u32 %s29, 1
        %s355 = scalar_lea.sflag [#allocation6], %s354
        %s356 = sand.u32 %s88, 1
        %s357 = smul.addr %s356, 8
        %s358 = scalar_lea.vmem [#allocation5], %s357
        %p359 = pneg %p101
        %p360 = pneg %p98
        %s361 = sand.u32 %s29, 1
        %s362 = scalar_lea.sflag [#allocation6], %s361
        %s363 = sand.u32 %s116, 1
        %s364 = smul.addr %s363, 8
        %s365 = scalar_lea.vmem [#allocation7], %s364
        %p366 = pneg %p129
        %p367 = pneg %p126
        %p368 = scmp.lt.s32.totalorder %s34, 1
        %s369 = scalar_select %p368, %s34, 1
        %p370 = scmp.lt.s32.totalorder %s36, 0
        %s371 = scalar_select %p370, %s36, 0
        %s372 = sadd.s32 %s371, %s369
        %s373 = smul.addr %s372, 2
        %s374 = scalar_lea.vmem %s3, %s373
        %p375 = pneg %p157
        %p376 = pneg %p154
        %p377 = pneg %p187
        %p378 = pneg %p184
        %s379 = sand.u32 %s174, 1
        %s380 = scalar_lea.sflag [#allocation4], %s379
        %s381 = sand.u32 %s174, 1
        %s382 = smul.addr %s381, 8
        %s383 = scalar_lea.vmem [#allocation8], %s382
        %p384 = pneg %p217
        %p385 = pneg %p214
        %s386 = sand.u32 %s204, 1
        %s387 = scalar_lea.sflag [#allocation10], %s386
        %s388 = sand.u32 %s204, 1
        %s389 = smul.addr %s388, 8
        %s390 = scalar_lea.vmem [#allocation9], %s389
        %p391 = scmp.lt.s32.totalorder %s34, 1
        %s392 = scalar_select %p391, %s34, 1
        %p393 = scmp.lt.s32.totalorder %s36, 0
        %s394 = scalar_select %p393, %s36, 0
        %s395 = sadd.s32 %s394, %s392
        %s396 = smul.addr %s395, 2
        %s397 = scalar_lea.vmem %s3, %s396
        %v401 = vld [vmem:[%s321] sm:$0xff]
        %v402 = vpack.c.bf16 %v401, %v401
        %v403 = vld [vmem:[%s331] sm:$0xff]
        %v404 = vpack.c.bf16 %v403, %v403
        %v405 = vld [vmem:[%s341] sm:$0xff]
        %v406 = vpack.c.bf16 %v405, %v405
        %v407 = vld [vmem:[%s397] sm:$0x3]
        %vm408 = vnez %v407
        %vm409 = vcmask 523264
        %v411 = vsel %vm409, %v402, 0
        %v414 = vsel %vm409, %v404, 0
        %416 = vmatpush.bf16.xpose.msra.mxu0 0
        %417 = vmatpush.bf16.xpose.msra.mxu0 0
        %418 = vmatpush.bf16.xpose.msra.mxu0 0
        %419 = vmatpush.bf16.xpose.msra.mxu0 0
        %420 = vmatpush.bf16.xpose.msra.mxu0 0
        %421 = vmatpush.bf16.xpose.msra.mxu0 0
        %422 = vmatpush.bf16.xpose.msra.mxu0 0
        %423 = vmatpush.bf16.xpose.msra.mxu0 %v414
        %424 = vmatmul.bf16.gmra.mxu0 %v411
        %v425 = vpop.f32.mrf.mxu0
        %v426 = vadd.f32 0.0, %v425
        %v427 = vpop.f32.mrf.mxu0
        %428 = vdwg.mxu0
        %v429 = vmul.f32 %v426, 0.125
        %v430 = vsel %vm408, 16843009, 0
        %v431 = vunpack.c.0.s8 %v430
        %vm432 = vcmp.ne.s32.totalorder %v431, 0
        %v433 = vsel %vm432, -1e+09, %v429
        %vm434 = vcmask 64512
        %v435 = vsel %vm434, %v433, -inf
        %436 = vmax.xlane.f32.xlu0 %v435
        %v437 = vpop.xlane.xlu0 %436
        %v438 = vsub.f32 %v433, %v437
        %v439 = vpack.c.bf16 %v438, %v438
        %v440 = vunpack.c.l.bf16 %v439
        %v441 = vmul.f32 %v440, 1.442695
        %v442 = vpow.pop %v441
        %v443 = vpack.c.bf16 %v442, %v442
        %v444 = vunpack.c.l.bf16 %v443
        %v445 = vsel %vm434, %v444, 0.0
        %446 = vadd.xlane.f32.xlu0 %v445
        %v447 = vpop.xlane.xlu0 %446
        %v448 = vrcp.pop %v447
        %v450 = vsel %vm434, %v443, 0
        %vm452 = vcmask 1043456
        %v454 = vsel %vm452, %v406, 0
        %456 = vmatpush.bf16.msra.mxu0 0
        %457 = vmatpush.bf16.msra.mxu0 0
        %458 = vmatpush.bf16.msra.mxu0 0
        %459 = vmatpush.bf16.msra.mxu0 0
        %460 = vmatpush.bf16.msra.mxu0 0
        %461 = vmatpush.bf16.msra.mxu0 0
        %462 = vmatpush.bf16.msra.mxu0 0
        %463 = vmatpush.bf16.msra.mxu0 %v454
        %464 = vmatmul.bf16.gmra.mxu0 %v450
        %v465 = vpop.f32.mrf.mxu0
        %v466 = vadd.f32 0.0, %v465
        %v467 = vpop.f32.mrf.mxu0
        %468 = vdwg.mxu0
        %v469 = vmul.f32 %v466, %v448
        %470 = vst.msk [vmem:[%s383] sm:$0xff] %vm409, %v469
        %v471 = vmul.f32 %v444, %v448
        %472 = vst.msk [vmem:[%s390] sm:$0xff] %vm434, %v471
        %s473 = sand.u32 %s174, 1
        %s474 = scalar_lea.sflag [#allocation4], %s473
        %s475 = sand.u32 %s174, 1
        %s476 = smul.addr %s475, 8
        %s477 = scalar_lea.vmem [#allocation8], %s476
        %s478 = sand.u32 %s204, 1
        %s479 = scalar_lea.sflag [#allocation10], %s478
        %s480 = sand.u32 %s204, 1
        %s481 = smul.addr %s480, 8
        %s482 = scalar_lea.vmem [#allocation9], %s481
        // Predicated region
        $region49: #{scaled_dot_product.1} parent=35 // pred_check
          %p483 = pneg %p184
        $region50: #{scaled_dot_product.1} parent=35 // pred_check_branch
          %485 = sbr.rel (%p483) target = $region52
        $region51: #{scaled_dot_product.1} parent=35 // pred_region
          %487 = vsyncadd %s474, 0
          %s488 = sadd.s32 %s36, %s35
          %s489 = smul.addr %s34, 8
          %s490 = sadd.s32 %s488, %s489
          %s491 = smul.addr %s490, 8
          %s492 = scalar_lea.hbm %s4, %s491
          %s494 = sshll.u32 %s477, 4
          %s495 = int_to_ptr.vmem [resolvable:$true] %s494
          %s496 = sshll.u32 %s492, 4
          %s497 = int_to_ptr.hbm [resolvable:$true] %s496
          %499 = dma.vmem_to_hbm [thread:$0]  %s495, 128, %s497, %s474
        $region52: #{scaled_dot_product.1} parent=35 // pred_fallthru
          _
        // Predicated region
        $region53: #{scaled_dot_product.1} parent=35 // pred_check
          %p500 = pneg %p214
        $region54: #{scaled_dot_product.1} parent=35 // pred_check_branch
          %502 = sbr.rel (%p500) target = $region56
        $region55: #{scaled_dot_product.1} parent=35 // pred_region
          %504 = vsyncadd %s479, 0
          %s505 = sadd.s32 %s36, %s35
          %s506 = smul.addr %s34, 8
          %s507 = sadd.s32 %s505, %s506
          %s508 = smul.addr %s507, 8
          %s509 = scalar_lea.hbm %s5, %s508
          %s511 = sshll.u32 %s482, 4
          %s512 = int_to_ptr.vmem [resolvable:$true] %s511
          %s513 = sshll.u32 %s509, 4
          %s514 = int_to_ptr.hbm [resolvable:$true] %s513
          %516 = dma.vmem_to_hbm [thread:$0]  %s512, 128, %s514, %s479
        $region56: #{scaled_dot_product.1} parent=35 // pred_fallthru
          _
      $region36: #{scaled_dot_product.1} parent=5 // pred_fallthru
        _
      %p517 = scmp.le.s32.totalorder 2, %s24
      // Predicated region
      $region57: #{scaled_dot_product.1} parent=5 // pred_check
        %p518 = pneg %p517
      $region58: #{scaled_dot_product.1} parent=5 // pred_check_branch
        %520 = sbr.rel (%p518) target = $region60
      $region59: #{scaled_dot_product.1} parent=5 // pred_region
        %s521 = ssub.s32 %s24, 2
        // Predicated region
        $region61: #{scaled_dot_product.1} parent=59 // pred_check
          %p522 = pneg %p190
        $region62: #{scaled_dot_product.1} parent=59 // pred_check_branch
          %524 = sbr.rel (%p522) target = $region64
        $region63: #{scaled_dot_product.1} parent=59 // pred_region
          %s525 = sand.u32 %s175, 1
          %s526 = scalar_lea.sflag [#allocation4], %s525
          %s527 = sand.u32 %s175, 1
          %s528 = smul.addr %s527, 8
          %s529 = scalar_lea.vmem [#allocation8], %s528
          %531 = dma.done %s526, 128
        $region64: #{scaled_dot_product.1} parent=59 // pred_fallthru
          _
        // Predicated region
        $region65: #{scaled_dot_product.1} parent=59 // pred_check
          %p532 = pneg %p220
        $region66: #{scaled_dot_product.1} parent=59 // pred_check_branch
          %534 = sbr.rel (%p532) target = $region68
        $region67: #{scaled_dot_product.1} parent=59 // pred_region
          %s535 = sand.u32 %s205, 1
          %s536 = scalar_lea.sflag [#allocation10], %s535
          %s537 = sand.u32 %s205, 1
          %s538 = smul.addr %s537, 8
          %s539 = scalar_lea.vmem [#allocation9], %s538
          %541 = dma.done %s536, 128
        $region68: #{scaled_dot_product.1} parent=59 // pred_fallthru
          _
      $region60: #{scaled_dot_product.1} parent=5 // pred_fallthru
        _
    $region6: #{scaled_dot_product.1} parent=1 // loop_footer
      %s28 = sadd.s32 1, %s24
    $region7: #{scaled_dot_product.1} parent=1 // loop_footer_branch
      %23 = sbr.rel target = $region3
    $region8: #{scaled_dot_product.1} parent=1 // loop_exit
      _
    %542 = vsyncpa [#allocation3], 1
    %s543 = scalar_lea.sflag [#allocation3], 1
    %544 = vsyncpa %s543, 1
    %545 = vsyncpa [#allocation6], 1
    %s546 = scalar_lea.sflag [#allocation6], 1
    %547 = vsyncpa %s546, 1
    %548 = vsyncpa [#allocation4], 1
    %s549 = scalar_lea.sflag [#allocation4], 1
    %550 = vsyncpa %s549, 1
    %551 = vsyncpa [#allocation10], 1
    %s552 = scalar_lea.sflag [#allocation10], 1
    %553 = vsyncpa %s552, 1

</llo_original>
